<compile_context>
chip_gen: v7x
topology: tpu7x:2x2x1
jax: 0.10.0
libtpu: 0.0.40
codegen_flags: <defaults>
</compile_context>

<pallas_src>
import jax
import jax.numpy as jnp
from jax import lax
from jax.experimental import pallas as pl
from jax.experimental.pallas import tpu as pltpu

EPS = 1e-5


def _pick_tile(n, target):
    """Largest multiple of 8 that divides n and is <= target; else n (single tile)."""
    t = min(target, n)
    for cand in range(t - t % 8, 0, -8):
        if n % cand == 0:
            return cand
    return n


# ------------------------------ Pallas kernels ------------------------------

def _proj_kernel(x_ref, w_ref, b_ref, o_ref):
    """out = relu(x @ W + shift) — proj Linear with folded BN."""
    acc = jnp.dot(x_ref[...], w_ref[...], preferred_element_type=jnp.float32)
    o_ref[...] = jnp.maximum(acc + b_ref[...], 0.0).astype(o_ref.dtype)


def proj_fused(x, w, shift, tile_m=256):
    M, cin = x.shape
    cout = w.shape[1]
    tile_m = _pick_tile(M, tile_m)
    return pl.pallas_call(
        _proj_kernel,
        out_shape=jax.ShapeDtypeStruct((M, cout), x.dtype),
        grid=(M // tile_m,),
        in_specs=[
            pl.BlockSpec((tile_m, cin), lambda i: (i, 0)),
            pl.BlockSpec((cin, cout), lambda i: (0, 0)),
            pl.BlockSpec((1, cout), lambda i: (0, 0)),
        ],
        out_specs=pl.BlockSpec((tile_m, cout), lambda i: (i, 0)),
        compiler_params=pltpu.CompilerParams(dimension_semantics=("parallel",)),
    )(x, w, shift.reshape(1, cout))


def _qkv_kernel(x_ref, fc1w_ref, fc1b_ref, wqkv_ref, bqkv_ref, o_ref):
    """Fused fc1(+norm1)+ReLU then [q|k|v] projections (+folded BN, ReLU on q,k)."""
    C = fc1w_ref.shape[1]
    h = jnp.dot(x_ref[...], fc1w_ref[...], preferred_element_type=jnp.float32)
    h = jnp.maximum(h + fc1b_ref[...], 0.0)                     # act(norm1(fc1(x)))
    z = jnp.dot(h, wqkv_ref[...], preferred_element_type=jnp.float32) + bqkv_ref[...]
    col = lax.broadcasted_iota(jnp.int32, (1, 3 * C), 1)
    z = jnp.where(col < 2 * C, jnp.maximum(z, 0.0), z)          # ReLU on q,k; none on v
    o_ref[...] = z.astype(o_ref.dtype)


def qkv_fused(x, fc1_w, fc1_b, qkv_w, qkv_b, tile_m=256):
    M, C = x.shape
    tile_m = _pick_tile(M, tile_m)
    return pl.pallas_call(
        _qkv_kernel,
        out_shape=jax.ShapeDtypeStruct((M, 3 * C), x.dtype),
        grid=(M // tile_m,),
        in_specs=[
            pl.BlockSpec((tile_m, C), lambda i: (i, 0)),
            pl.BlockSpec((C, C), lambda i: (0, 0)),
            pl.BlockSpec((1, C), lambda i: (0, 0)),
            pl.BlockSpec((C, 3 * C), lambda i: (0, 0)),
            pl.BlockSpec((1, 3 * C), lambda i: (0, 0)),
        ],
        out_specs=pl.BlockSpec((tile_m, 3 * C), lambda i: (i, 0)),
        compiler_params=pltpu.CompilerParams(dimension_semantics=("parallel",)),
    )(x, fc1_w, fc1_b.reshape(1, C), qkv_w, qkv_b.reshape(1, 3 * C))


def _gva_block_kernel(idx_ref, feat_ref, qkv_ref, coord_ref,
                      pe1w_ref, pe1b_ref, pe2w_ref, pe2b_ref,
                      we1w_ref, we1b_ref, we2w_ref, we2b_ref,
                      bn2s_ref, bn2t_ref, fc3w_ref, fc3b_ref,
                      o_ref):
    """Gather + pe-MLP + grouped vector attention + norm2/ReLU + fc3 + residual."""
    tn, K = idx_ref.shape
    N = qkv_ref.shape[0]
    C = feat_ref.shape[1]
    row0 = pl.multiple_of(pl.program_id(0) * tn, tn)

    identity = feat_ref[...]                                     # (tn, C)
    qkv_tile = qkv_ref[pl.ds(row0, tn), :]                       # (tn, 3C)
    q = qkv_tile[:, 0:C]                                         # (tn, C)
    center = coord_ref[pl.ds(row0, tn), :]                       # (tn, 3)

    qkv_all = qkv_ref[...]                                       # (N, 3C) table, VMEM-resident
    k_tab = qkv_all[:, C:2 * C]
    v_tab = qkv_all[:, 2 * C:3 * C]
    coord_all = coord_ref[...]                                   # (N, 3)

    # Neighbour gather as one-hot matmul (index -1 -> all-zero row, matching
    # pointops.grouping padding). TODO(synk): for large N replace with a
    # scalar-prefetch / DMA row gather; one-hot gather is O(N) per row.
    idx = idx_ref[...]                                           # (tn, K) int32
    onehot = (idx[:, :, None] ==
              lax.broadcasted_iota(jnp.int32, (tn, K, N), 2)).astype(jnp.float32)
    onehot = onehot.reshape(tn * K, N)
    key_g = jnp.dot(onehot, k_tab, preferred_element_type=jnp.float32)     # (tn*K, C)
    val_g = jnp.dot(onehot, v_tab, preferred_element_type=jnp.float32)     # (tn*K, C)
    nbr_c = jnp.dot(onehot, coord_all, preferred_element_type=jnp.float32)  # (tn*K, 3)

    # relative positions + positional-encoding bias MLP (linear_p_bias), fused
    center_rep = jnp.broadcast_to(center[:, None, :], (tn, K, 3)).reshape(tn * K, 3)
    pos = nbr_c - center_rep
    h = jnp.dot(pos, pe1w_ref[...], preferred_element_type=jnp.float32) + pe1b_ref[...]
    h = jnp.maximum(h, 0.0)
    peb = jnp.dot(h, pe2w_ref[...], preferred_element_type=jnp.float32) + pe2b_ref[...]

    # relation_qk and value with the pe bias
    q_rep = jnp.broadcast_to(q[:, None, :], (tn, K, C)).reshape(tn * K, C)
    rel = key_g - q_rep + peb
    val = val_g + peb

    # weight encoding: Linear(C->G)+BN+ReLU (folded, G zero-padded), then
    # Linear(G->G) pre-expanded group->channel in the wrapper.
    hw = jnp.dot(rel, we1w_ref[...], preferred_element_type=jnp.float32) + we1b_ref[...]
    hw = jnp.maximum(hw, 0.0)
    wgt = jnp.dot(hw, we2w_ref[...], preferred_element_type=jnp.float32) + we2b_ref[...]

    # softmax over the neighbour axis (PyTorch dim=1); mask applied post-softmax,
    # exactly as the reference module does.
    wgt3 = wgt.reshape(tn, K, C)
    wgt3 = jnp.exp(wgt3 - jnp.max(wgt3, axis=1, keepdims=True))
    wgt3 = wgt3 * pl.reciprocal(jnp.sum(wgt3, axis=1, keepdims=True), approx=True)
    mask = (idx >= 0).astype(jnp.float32)                        # sign(idx + 1)
    wgt3 = wgt3 * mask[:, :, None]

    out = jnp.sum(val.reshape(tn, K, C) * wgt3, axis=1)          # (tn, C)

    # act(norm2(.)) then fc3(+norm3) + residual + act
    out = jnp.maximum(out * bn2s_ref[...] + bn2t_ref[...], 0.0)
    out = jnp.dot(out, fc3w_ref[...], preferred_element_type=jnp.float32) + fc3b_ref[...]
    o_ref[...] = jnp.maximum(out + identity, 0.0).astype(o_ref.dtype)


def gva_block(ref_idx, feat, qkv, coord, p, tile_n=256):
    N, C = feat.shape
    K = ref_idx.shape[1]
    Gp = p["we1_w"].shape[1]
    tile_n = _pick_tile(N, tile_n)
    # TODO(synk): qkv/coord tables are kept fully VMEM-resident; for very large
    # point clouds re-derive tile_n / vmem_limit_bytes (v7x has 64 MiB per TC).
    in_specs = [
        pl.BlockSpec((tile_n, K), lambda i: (i, 0)),
        pl.BlockSpec((tile_n, C), lambda i: (i, 0)),
        pl.BlockSpec((N, 3 * C), lambda i: (0, 0)),
        pl.BlockSpec((N, 3), lambda i: (0, 0)),
        pl.BlockSpec((3, C), lambda i: (0, 0)),
        pl.BlockSpec((1, C), lambda i: (0, 0)),
        pl.BlockSpec((C, C), lambda i: (0, 0)),
        pl.BlockSpec((1, C), lambda i: (0, 0)),
        pl.BlockSpec((C, Gp), lambda i: (0, 0)),
        pl.BlockSpec((1, Gp), lambda i: (0, 0)),
        pl.BlockSpec((Gp, C), lambda i: (0, 0)),
        pl.BlockSpec((1, C), lambda i: (0, 0)),
        pl.BlockSpec((1, C), lambda i: (0, 0)),
        pl.BlockSpec((1, C), lambda i: (0, 0)),
        pl.BlockSpec((C, C), lambda i: (0, 0)),
        pl.BlockSpec((1, C), lambda i: (0, 0)),
    ]
    return pl.pallas_call(
        _gva_block_kernel,
        out_shape=jax.ShapeDtypeStruct((N, C), feat.dtype),
        grid=(N // tile_n,),
        in_specs=in_specs,
        out_specs=pl.BlockSpec((tile_n, C), lambda i: (i, 0)),
        compiler_params=pltpu.CompilerParams(dimension_semantics=("parallel",)),
    )(ref_idx, feat, qkv, coord,
      p["pe1_w"], p["pe1_b"].reshape(1, C),
      p["pe2_w"], p["pe2_b"].reshape(1, C),
      p["we1_w"], p["we1_b"].reshape(1, Gp),
      p["we2e_w"], p["we2e_b"].reshape(1, C),
      p["bn2_s"].reshape(1, C), p["bn2_t"].reshape(1, C),
      p["fc3_w"], p["fc3_b"].reshape(1, C))


# ----------------------------- parameter setup ------------------------------

def _linear_init(key, fan_in, fan_out, bias=True):
    bound = 1.0 / float(fan_in) ** 0.5
    kw, kb = jax.random.split(key)
    w = jax.random.uniform(kw, (fan_in, fan_out), jnp.float32, -bound, bound)
    if bias:
        b = jax.random.uniform(kb, (fan_out,), jnp.float32, -bound, bound)
    else:
        b = jnp.zeros((fan_out,), jnp.float32)
    return w, b


def _bn_affine(c):
    # PyTorch BatchNorm1d defaults, eval mode: gamma=1, beta=0, mean=0, var=1.
    gamma = jnp.ones((c,), jnp.float32)
    beta = jnp.zeros((c,), jnp.float32)
    mean = jnp.zeros((c,), jnp.float32)
    var = jnp.ones((c,), jnp.float32)
    s = gamma / jnp.sqrt(var + EPS)
    t = beta - mean * s
    return s, t


def _fold(w, b, s, t):
    return w * s[None, :], b * s + t


def init_params(key, in_channels, embed_channels, groups, depth):
    C, G = embed_channels, groups
    assert C % G == 0
    Gp = max(G, 8)                 # pad group dim for sublane/MXU friendliness (exact)
    keys = jax.random.split(key, 1 + depth)
    # proj: Linear(in, C, bias=False) + BN + ReLU
    wp, _ = _linear_init(keys[0], in_channels, C, bias=False)
    s, t = _bn_affine(C)
    params = {"proj": {"w": wp * s[None, :], "b": t}, "blocks": []}
    # group -> channel expansion matrix E[g, c] = 1 if c // (C//G) == g
    i = C // G
    E = (jnp.arange(C)[None, :] // i == jnp.arange(G)[:, None]).astype(jnp.float32)
    for d in range(depth):
        sub = jax.random.split(keys[1 + d], 9)
        blk = {}
        w, _ = _linear_init(sub[0], C, C, bias=False)                 # fc1 (+ norm1)
        s, t = _bn_affine(C)
        blk["fc1_w"], blk["fc1_b"] = w * s[None, :], t
        w, b = _linear_init(sub[1], C, C, bias=True)                  # linear_q (+BN)
        s, t = _bn_affine(C)
        wq, bq = _fold(w, b, s, t)
        w, b = _linear_init(sub[2], C, C, bias=True)                  # linear_k (+BN)
        s, t = _bn_affine(C)
        wk, bk = _fold(w, b, s, t)
        wv, bv = _linear_init(sub[3], C, C, bias=True)                # linear_v
        blk["qkv_w"] = jnp.concatenate([wq, wk, wv], axis=1)          # (C, 3C)
        blk["qkv_b"] = jnp.concatenate([bq, bk, bv], axis=0)          # (3C,)
        w, b = _linear_init(sub[4], 3, C, bias=True)                  # linear_p_bias[0] (+BN)
        s, t = _bn_affine(C)
        blk["pe1_w"], blk["pe1_b"] = _fold(w, b, s, t)
        blk["pe2_w"], blk["pe2_b"] = _linear_init(sub[5], C, C, bias=True)  # linear_p_bias[3]
        w, b = _linear_init(sub[6], C, G, bias=True)                  # weight_encoding[0] (+BN)
        s, t = _bn_affine(G)
        w1, b1 = _fold(w, b, s, t)
        blk["we1_w"] = jnp.pad(w1, ((0, 0), (0, Gp - G)))             # (C, Gp)
        blk["we1_b"] = jnp.pad(b1, (0, Gp - G))                       # (Gp,)
        w2, b2 = _linear_init(sub[7], G, G, bias=True)                # weight_encoding[3]
        blk["we2e_w"] = jnp.pad(w2 @ E, ((0, Gp - G), (0, 0)))        # (Gp, C) pre-expanded
        blk["we2e_b"] = b2 @ E                                        # (C,)
        blk["bn2_s"], blk["bn2_t"] = _bn_affine(C)                    # norm2 (fused in GVA kernel)
        w, _ = _linear_init(sub[8], C, C, bias=False)                 # fc3 (+ norm3)
        s, t = _bn_affine(C)
        blk["fc3_w"], blk["fc3_b"] = w * s[None, :], t
        params["blocks"].append(blk)
    return params


# ------------------------------- forward glue --------------------------------

def knn_query(coord, offset, k):
    # pointops.knn_query: per-batch (offset = cumulative point counts) k-NN indices.
    # TODO(synk): data-dependent k-NN kept in plain JAX glue (not a Pallas kernel).
    N = coord.shape[0]
    batch = jnp.sum(jnp.arange(N)[:, None] >= offset[None, :], axis=1)
    d2 = jnp.sum((coord[:, None, :] - coord[None, :, :]) ** 2, axis=-1)
    d2 = jnp.where(batch[:, None] == batch[None, :], d2, jnp.inf)
    _, idx = jax.lax.top_k(-d2, k)
    return idx.astype(jnp.int32)


def block_forward(p, coord, feat, ref_idx):
    # Whole Block (fc1/norm1/act, GroupedVectorAttention, norm2/act, fc3/norm3,
    # residual, act) in exactly two pallas_calls.
    qkv = qkv_fused(feat, p["fc1_w"], p["fc1_b"], p["qkv_w"], p["qkv_b"])
    return gva_block(ref_idx, feat, qkv, coord, p)


def gva_patch_embed_forward(params, coord, feat, offset, neighbours=8):
    feat = proj_fused(feat, params["proj"]["w"], params["proj"]["b"])
    ref_idx = knn_query(coord, offset, neighbours)
    for blk in params["blocks"]:
        feat = block_forward(blk, coord, feat, ref_idx)
    return coord, feat, offset


# TODO(synk): BatchNorm uses eval-mode running statistics (folded affine); training-mode
# batch statistics are not computed inside the kernels.

if __name__ == "__main__":
    N, IN_C, EMB_C, GROUPS, NEIGH, DEPTH = 64, 6, 32, 4, 8, 2
    key = jax.random.PRNGKey(0)
    k_coord, k_feat, k_params = jax.random.split(key, 3)
    coord = jax.random.normal(k_coord, (N, 3), jnp.float32)
    feat = jax.random.normal(k_feat, (N, IN_C), jnp.float32)
    offset = jnp.array([N], dtype=jnp.int32)
    params = init_params(k_params, IN_C, EMB_C, GROUPS, DEPTH)

    coord_o, feat_o, offset_o = gva_patch_embed_forward(params, coord, feat, offset,
                                                        neighbours=NEIGH)
    jax.block_until_ready(feat_o)
    assert feat_o.shape == (N, EMB_C) and feat_o.dtype == jnp.float32
    print("KERNEL_OK")
</pallas_src>

<mosaic_0001>
module attributes {stable_mosaic.version = 11 : i64} {
  func.func @_proj_kernel(%arg0: i32, %arg1: memref<64x6xf32, #tpu.memory_space<vmem>>, %arg2: memref<6x32xf32, #tpu.memory_space<vmem>>, %arg3: memref<1x32xf32, #tpu.memory_space<vmem>>, %arg4: memref<64x32xf32, #tpu.memory_space<vmem>>) attributes {dimension_semantics = [#tpu.dimension_semantics<parallel>], iteration_bounds = array<i64: 1>, scalar_prefetch = 0 : i64, scratch_operands = 0 : i64, tpu.core_type = #tpu.core_type<tc>, window_params = [{transform_indices = @transform_0, window_bounds = array<i64: 64, 6>}, {pipeline_mode = #tpu.pipeline_mode<synchronous>, transform_indices = @transform_1, window_bounds = array<i64: 6, 32>}, {pipeline_mode = #tpu.pipeline_mode<synchronous>, transform_indices = @transform_2, window_bounds = array<i64: 1, 32>}, {transform_indices = @transform_3, window_bounds = array<i64: 64, 32>}]} {
    %c0 = arith.constant 0 : index
    %c0_0 = arith.constant 0 : index
    %0 = vector.load %arg1[%c0, %c0_0] : memref<64x6xf32, #tpu.memory_space<vmem>>, vector<64x6xf32>
    %c0_1 = arith.constant 0 : index
    %c0_2 = arith.constant 0 : index
    %1 = vector.load %arg2[%c0_1, %c0_2] : memref<6x32xf32, #tpu.memory_space<vmem>>, vector<6x32xf32>
    %cst = arith.constant dense<0.000000e+00> : vector<64x32xf32>
    %2 = tpu.matmul %0, %1, %cst {dimension_numbers = #tpu.dot_dimension_numbers<[1], [0], [0], [1], [0, 0, 1, 1], [], []>} : vector<64x6xf32>, vector<6x32xf32>, vector<64x32xf32> -> vector<64x32xf32>
    %c0_3 = arith.constant 0 : index
    %c0_4 = arith.constant 0 : index
    %3 = vector.load %arg3[%c0_3, %c0_4] : memref<1x32xf32, #tpu.memory_space<vmem>>, vector<1x32xf32>
    %4 = vector.broadcast %3 : vector<1x32xf32> to vector<64x32xf32>
    %5 = arith.addf %2, %4 : vector<64x32xf32>
    %cst_5 = arith.constant 0.000000e+00 : f32
    %6 = vector.broadcast %cst_5 : f32 to vector<64x32xf32>
    %7 = arith.maximumf %5, %6 : vector<64x32xf32>
    %c0_6 = arith.constant 0 : index
    %c0_7 = arith.constant 0 : index
    %8 = vector.load %arg4[%c0_6, %c0_7] : memref<64x32xf32, #tpu.memory_space<vmem>>, vector<64x32xf32>
    tpu.vector_store %arg4[%c0_6, %c0_7], %7 {strides = array<i32>} : memref<64x32xf32, #tpu.memory_space<vmem>>, vector<64x32xf32>,
    return
  }
  func.func @transform_0(%arg0: i32) -> (i32, i32) {
    %c0_i32 = arith.constant 0 : i32
    %c0_i32_0 = arith.constant 0 : i32
    return %arg0, %c0_i32 : i32, i32
  }
  func.func @transform_1(%arg0: i32) -> (i32, i32) {
    %c0_i32 = arith.constant 0 : i32
    %c0_i32_0 = arith.constant 0 : i32
    %c0_i32_1 = arith.constant 0 : i32
    return %c0_i32, %c0_i32_0 : i32, i32
  }
  func.func @transform_2(%arg0: i32) -> (i32, i32) {
    %c0_i32 = arith.constant 0 : i32
    %c0_i32_0 = arith.constant 0 : i32
    %c0_i32_1 = arith.constant 0 : i32
    return %c0_i32, %c0_i32_0 : i32, i32
  }
  func.func @transform_3(%arg0: i32) -> (i32, i32) {
    %c0_i32 = arith.constant 0 : i32
    %c0_i32_0 = arith.constant 0 : i32
    return %arg0, %c0_i32 : i32, i32
  }
}

</mosaic_0001>

<llo_original>
// kernel: tpu_custom_call.1
$region0: #{tpu_custom_call.1}
  #allocation0 [shape = 'u32[]', space=smem, size = 0x4, offset = 0x4, fixed_abs, tag = 'smem constant byte address 0x4 - core index']
  #allocation1 [shape = 'u32[144,128]{1,0:T(1,128)}', space=vmem, size = 0x12000, scoped, tag = 'internal scratch']
  %s0 = inlined_call_operand.vmem [shape: f32[64,6], index: 0, kind: input, shape index: {}]
  %s1 = inlined_call_operand.vmem [shape: f32[6,32], index: 1, kind: input, shape index: {}]
  %s2 = inlined_call_operand.vmem [shape: f32[1,32], index: 2, kind: input, shape index: {}]
  %s3 = inlined_call_operand.vmem [shape: f32[64,32], index: 3, kind: output, shape index: {}]
  %s4 = sld [smem:[#allocation0]]
  $region22: #{tpu_custom_call.1} parent=0
    _
  %s6 = ssub.s32 1, %s4
  %s7 = scalar_select 0, %s6, %s4
  // Predicated region
  $region2: #{tpu_custom_call.1} parent=0 // pred_check
    _
  $region3: #{tpu_custom_call.1} parent=0 // pred_check_branch
    %9 = sbr.rel (0) target = $region5
  $region4: #{tpu_custom_call.1} parent=0 // pred_region
    _
  $region5: #{tpu_custom_call.1} parent=0 // pred_fallthru
    _
  // Predicated region
  $region6: #{tpu_custom_call.1} parent=0 // pred_check
    _
  $region7: #{tpu_custom_call.1} parent=0 // pred_check_branch
    %11 = sbr.rel (0) target = $region9
  $region8: #{tpu_custom_call.1} parent=0 // pred_region
    _
  $region9: #{tpu_custom_call.1} parent=0 // pred_fallthru
    _
  // Predicated region
  $region10: #{tpu_custom_call.1} parent=0 // pred_check
    _
  $region11: #{tpu_custom_call.1} parent=0 // pred_check_branch
    %13 = sbr.rel (0) target = $region13
  $region12: #{tpu_custom_call.1} parent=0 // pred_region
    _
  $region13: #{tpu_custom_call.1} parent=0 // pred_fallthru
    _
  %v14 = vld [vmem:[%s0] sm:$0xff]
  %v15 = vld [vmem:[%s0 + $0x8] sm:$0xff]
  %v16 = vld [vmem:[%s0 + $0x10] sm:$0xff]
  %v17 = vld [vmem:[%s0 + $0x18] sm:$0xff]
  %v18 = vld [vmem:[%s0 + $0x20] sm:$0xff]
  %v19 = vld [vmem:[%s0 + $0x28] sm:$0xff]
  %v20 = vld [vmem:[%s0 + $0x30] sm:$0xff]
  %v21 = vld [vmem:[%s0 + $0x38] sm:$0xff]
  %v22 = vld [vmem:[%s1] sm:$0x3f]
  %v23 = vld [vmem:[%s2] sm:$0x1]
  %v25 = vlaneseq
  %v26 = vshrl.u32 %v25, 7
  %v27 = vsub.s32 0, %v26
  %v28 = vrot.slane %v23, %v27
  %vm30 = vcmask 48128
  %v32 = vsel %vm30, %v14, 0
  %v35 = vsel %vm30, %v15, 0
  %v38 = vsel %vm30, %v16, 0
  %v41 = vsel %vm30, %v17, 0
  %v44 = vsel %vm30, %v18, 0
  %v47 = vsel %vm30, %v19, 0
  %v50 = vsel %vm30, %v20, 0
  %v53 = vsel %vm30, %v21, 0
  %vm55 = vcmask 1045504
  %v57 = vsel %vm55, %v22, 0
  %59 = vmatprep.subr.mxu0 0.0
  %60 = vmatpush1.msra.mxu0 %v57
  %61 = vmatprep.subr.mxu0 0.0
  %62 = vmatpush1.msra.mxu0 0.0
  %63 = vmatprep.subr.mxu0 0.0
  %64 = vmatpush1.msra.mxu0 0.0
  %65 = vmatprep.subr.mxu0 0.0
  %66 = vmatpush1.msra.mxu0 0.0
  %67 = vmatprep.subr.mxu0 0.0
  %68 = vmatpush1.msra.mxu0 0.0
  %69 = vmatprep.subr.mxu0 0.0
  %70 = vmatpush1.msra.mxu0 0.0
  %71 = vmatprep.subr.mxu0 0.0
  %72 = vmatpush1.msra.mxu0 0.0
  %73 = vmatprep.subr.mxu0 0.0
  %74 = vmatpush1.msra.mxu0 0.0
  %75 = vmatprep.subr.mxu0 0.0
  %76 = vmatpush1.msra.mxu0 0.0
  %77 = vmatprep.subr.mxu0 0.0
  %78 = vmatpush1.msra.mxu0 0.0
  %79 = vmatprep.subr.mxu0 0.0
  %80 = vmatpush1.msra.mxu0 0.0
  %81 = vmatprep.subr.mxu0 0.0
  %82 = vmatpush1.msra.mxu0 0.0
  %83 = vmatprep.subr.mxu0 0.0
  %84 = vmatpush1.msra.mxu0 0.0
  %85 = vmatprep.subr.mxu0 0.0
  %86 = vmatpush1.msra.mxu0 0.0
  %87 = vmatprep.subr.mxu0 0.0
  %88 = vmatpush1.msra.mxu0 0.0
  %89 = vmatprep.subr.mxu0 0.0
  %90 = vmatpush1.msra.mxu0 0.0
  %91 = vmatprep.subr.mxu0 0.0
  %92 = vmatpush1.msra.mxu0 0.0
  %93 = vmatprep.subr.mxu0 0.0
  %94 = vmatpush1.msra.mxu0 0.0
  %95 = vmatprep.subr.mxu0 0.0
  %96 = vmatpush1.msra.mxu0 0.0
  %97 = vmatprep.subr.mxu0 0.0
  %98 = vmatpush1.msra.mxu0 0.0
  %99 = vmatprep.subr.mxu0 0.0
  %100 = vmatpush1.msra.mxu0 0.0
  %101 = vmatprep.subr.mxu0 0.0
  %102 = vmatpush1.msra.mxu0 0.0
  %103 = vmatprep.subr.mxu0 0.0
  %104 = vmatpush1.msra.mxu0 0.0
  %105 = vmatprep.subr.mxu0 0.0
  %106 = vmatpush1.msra.mxu0 0.0
  %107 = vmatprep.subr.mxu0 0.0
  %108 = vmatpush1.msra.mxu0 0.0
  %109 = vmatprep.subr.mxu0 0.0
  %110 = vmatpush1.msra.mxu0 0.0
  %111 = vmatprep.subr.mxu0 0.0
  %112 = vmatpush1.msra.mxu0 0.0
  %113 = vmatprep.subr.mxu0 0.0
  %114 = vmatpush1.msra.mxu0 0.0
  %115 = vmatprep.subr.mxu0 0.0
  %116 = vmatpush1.msra.mxu0 0.0
  %117 = vmatprep.subr.mxu0 0.0
  %118 = vmatpush1.msra.mxu0 0.0
  %119 = vmatprep.subr.mxu0 0.0
  %120 = vmatpush1.msra.mxu0 0.0
  %121 = vmatprep.subr.mxu0 0.0
  %122 = vmatpush1.msra.mxu0 0.0
  %123 = vmatprep.mubr.f32.mxu0 0.0
  %124 = vmatmul.mubr.f32.gmra.mrb[0].mxu0 %v32
  %v125 = vpop.f32.mrb[0].mxu0
  %v126 = vadd.f32 %v28, %v125
  %v127 = vpop.f32.mrb[0].mxu0
  %128 = vmatprep.mubr.f32.mxu0 0.0
  %129 = vmatmul.mubr.f32.gmra.mrb[0].mxu0 %v35
  %v130 = vpop.f32.mrb[0].mxu0
  %v131 = vadd.f32 %v28, %v130
  %v132 = vpop.f32.mrb[0].mxu0
  %133 = vmatprep.mubr.f32.mxu0 0.0
  %134 = vmatmul.mubr.f32.gmra.mrb[0].mxu0 %v38
  %v135 = vpop.f32.mrb[0].mxu0
  %v136 = vadd.f32 %v28, %v135
  %v137 = vpop.f32.mrb[0].mxu0
  %138 = vmatprep.mubr.f32.mxu0 0.0
  %139 = vmatmul.mubr.f32.gmra.mrb[0].mxu0 %v41
  %v140 = vpop.f32.mrb[0].mxu0
  %v141 = vadd.f32 %v28, %v140
  %v142 = vpop.f32.mrb[0].mxu0
  %143 = vmatprep.mubr.f32.mxu0 0.0
  %144 = vmatmul.mubr.f32.gmra.mrb[0].mxu0 %v44
  %v145 = vpop.f32.mrb[0].mxu0
  %v146 = vadd.f32 %v28, %v145
  %v147 = vpop.f32.mrb[0].mxu0
  %148 = vmatprep.mubr.f32.mxu0 0.0
  %149 = vmatmul.mubr.f32.gmra.mrb[0].mxu0 %v47
  %v150 = vpop.f32.mrb[0].mxu0
  %v151 = vadd.f32 %v28, %v150
  %v152 = vpop.f32.mrb[0].mxu0
  %153 = vmatprep.mubr.f32.mxu0 0.0
  %154 = vmatmul.mubr.f32.gmra.mrb[0].mxu0 %v50
  %v155 = vpop.f32.mrb[0].mxu0
  %v156 = vadd.f32 %v28, %v155
  %v157 = vpop.f32.mrb[0].mxu0
  %158 = vmatprep.mubr.f32.mxu0 0.0
  %159 = vmatmul.mubr.f32.gmra.mrb[0].mxu0 %v53
  %v160 = vpop.f32.mrb[0].mxu0
  %v161 = vadd.f32 %v28, %v160
  %v162 = vpop.f32.mrb[0].mxu0
  %163 = vdwg.mxu0
  %v164 = vmax.f32 %v126, 0.0
  %v165 = vmax.f32 %v131, 0.0
  %v166 = vmax.f32 %v136, 0.0
  %v167 = vmax.f32 %v141, 0.0
  %v168 = vmax.f32 %v146, 0.0
  %v169 = vmax.f32 %v151, 0.0
  %v170 = vmax.f32 %v156, 0.0
  %v171 = vmax.f32 %v161, 0.0
  %vm172 = vcmask 261120
  %173 = vst.msk [vmem:[%s3] sm:$0xff] %vm172, %v164
  %174 = vst.msk [vmem:[%s3 + $0x8] sm:$0xff] %vm172, %v165
  %175 = vst.msk [vmem:[%s3 + $0x10] sm:$0xff] %vm172, %v166
  %176 = vst.msk [vmem:[%s3 + $0x18] sm:$0xff] %vm172, %v167
  %177 = vst.msk [vmem:[%s3 + $0x20] sm:$0xff] %vm172, %v168
  %178 = vst.msk [vmem:[%s3 + $0x28] sm:$0xff] %vm172, %v169
  %179 = vst.msk [vmem:[%s3 + $0x30] sm:$0xff] %vm172, %v170
  %180 = vst.msk [vmem:[%s3 + $0x38] sm:$0xff] %vm172, %v171
  // Predicated region
  $region14: #{tpu_custom_call.1} parent=0 // pred_check
    _
  $region15: #{tpu_custom_call.1} parent=0 // pred_check_branch
    %182 = sbr.rel (0) target = $region17
  $region16: #{tpu_custom_call.1} parent=0 // pred_region
    _
  $region17: #{tpu_custom_call.1} parent=0 // pred_fallthru
    _
  // Predicated region
  $region18: #{tpu_custom_call.1} parent=0 // pred_check
    _
  $region19: #{tpu_custom_call.1} parent=0 // pred_check_branch
    %184 = sbr.rel (0) target = $region21
  $region20: #{tpu_custom_call.1} parent=0 // pred_region
    _
  $region21: #{tpu_custom_call.1} parent=0 // pred_fallthru
    _

</llo_original>
